<compile_context>
chip_gen: v7x
topology: tpu7x:2x2x1
jax: 0.10.0
libtpu: 0.0.40
codegen_flags: <defaults>
</compile_context>

<pallas_src>
import functools

import jax
import jax.numpy as jnp
from jax import lax
from jax.experimental import pallas as pl
from jax.experimental.pallas import tpu as pltpu


def _round_up(x, m):
    return ((x + m - 1) // m) * m


def _padded_block_bytes(shape, dtype):
    """VMEM footprint of a block: minor dim padded to 128 lanes, second-minor
    padded to the dtype's sublane multiple (8 for 4B, 16 for 2B, 32 for 1B)."""
    itemsize = jnp.dtype(dtype).itemsize
    sub = (32 // itemsize) if itemsize <= 4 else 8
    if len(shape) == 1:
        return _round_up(shape[0], 128) * itemsize
    *lead, s, l = shape
    n = 1
    for d in lead:
        n *= d
    return n * _round_up(s, sub) * _round_up(l, 128) * itemsize


def _pa_kernel_single(hm_ref, feat_ref, out_ref, *, act):
    # hm_ref:   (Bt, J, HW)  natural-layout heatmaps
    # feat_ref: (Bt, C, HW)  features
    # out_ref:  (Bt, C, J)
    hm = hm_ref[...]
    if act == "sigmoid":
        # f32 sigmoid (v5e has no bf16 VPU/EUP path), cast back so both
        # matmul operands share a dtype.
        hm = jax.nn.sigmoid(hm.astype(jnp.float32)).astype(hm_ref.dtype)
    # 'softmax' in the reference module applies NO normalization.
    # out[b, c, j] = sum_hw feat[b, c, hw] * hm[b, j, hw]
    out = lax.dot_general(
        feat_ref[...],
        hm,
        dimension_numbers=(((2,), (2,)), ((0,), (0,))),
        preferred_element_type=jnp.float32,
    )
    out_ref[...] = out.astype(out_ref.dtype)


def _pa_kernel_ktiled(hm_ref, feat_ref, out_ref, acc_ref, *, act):
    # Same contraction, with the spatial axis split across grid axis 1 and
    # accumulated in a resident f32 VMEM scratch.
    k = pl.program_id(1)

    @pl.when(k == 0)
    def _():
        acc_ref[...] = jnp.zeros_like(acc_ref)

    hm = hm_ref[...]
    if act == "sigmoid":
        hm = jax.nn.sigmoid(hm.astype(jnp.float32)).astype(hm_ref.dtype)
    acc_ref[...] += lax.dot_general(
        feat_ref[...],
        hm,
        dimension_numbers=(((2,), (2,)), ((0,), (0,))),
        preferred_element_type=jnp.float32,
    )

    @pl.when(k == pl.num_programs(1) - 1)
    def _():
        out_ref[...] = acc_ref[...].astype(out_ref.dtype)


def _pick_spatial_tile(hw, blk_bytes_fn, budget):
    """Largest multiple-of-128 divisor of hw whose single-batch block fits the
    budget; falls back to the full extent when hw is not 128-tileable."""
    if blk_bytes_fn(hw) <= budget or hw % 128 != 0:
        return hw
    best = 128
    for tk in range(128, hw, 128):
        if hw % tk == 0 and blk_bytes_fn(tk) <= budget:
            best = tk
    return best


def _pick_batch_tile(batch, per_batch_bytes, budget, multi_core):
    """Batch elements per grid step.  Prefers exact divisors of `batch` within
    [cap/2, cap] (no padding), favouring an even grid length on multi-core
    chips; otherwise returns the budget cap and the caller pads the batch."""
    cap = max(1, budget // max(per_batch_bytes, 1))
    cap = min(cap, batch)
    if multi_core and batch >= 2:
        cap = min(cap, max(1, batch // 2))
    if cap <= 1:
        return 1
    lo = max(1, cap // 2)
    divisors = [bt for bt in range(cap, lo - 1, -1) if batch % bt == 0]
    if divisors:
        if multi_core:
            even = [bt for bt in divisors if (batch // bt) % 2 == 0]
            if even:
                return even[0]
        return divisors[0]
    return cap  # caller pads the batch up to a multiple of this


def part_attention(features, heatmaps, act="softmax", *, block_budget_bytes=None):
    """Pallas implementation of PartAttention.forward.

    features: (B, C, H, W)
    heatmaps: (B, J, H, W)
    returns:  (B, C, J)
    """
    B, C, H, W = features.shape
    Bh, J, Hh, Wh = heatmaps.shape
    assert (B, H, W) == (Bh, Hh, Wh), "feature / heatmap spatial dims must match"
    HW = H * W
    out_dtype = features.dtype

    feat = features.reshape(B, C, HW)
    hm = heatmaps.reshape(B, J, HW)  # natural layout; no wrapper transpose

    # --- hardware-aware budgets -------------------------------------------
    try:
        info = pltpu.get_tpu_info()
        vmem_cap = int(getattr(info, "vmem_capacity_bytes", 64 << 20))
    except Exception:  # interpret mode / unexpected env
        info = None
        vmem_cap = 64 << 20
    num_cores = 1
    if info is not None:
        for name in ("num_cores", "core_count", "num_tensorcores"):
            v = getattr(info, name, None)
            if isinstance(v, int) and v > 0:
                num_cores = v
                break
    multi_core = num_cores > 1

    if block_budget_bytes is None:
        # ~1/4 of VMEM per grid step -> ~1/2 live when double-buffered.
        block_budget_bytes = min(max(vmem_cap // 4, 8 << 20), 32 << 20)

    out_blk_bytes = _padded_block_bytes((1, C, J), out_dtype)

    def single_batch_bytes(tk):
        return (_padded_block_bytes((1, J, tk), hm.dtype)
                + _padded_block_bytes((1, C, tk), feat.dtype)
                + out_blk_bytes)

    tk = _pick_spatial_tile(HW, single_batch_bytes, block_budget_bytes)
    n_k = HW // tk
    per_batch_bytes = single_batch_bytes(tk)

    bt = _pick_batch_tile(B, per_batch_bytes, block_budget_bytes, multi_core)

    # Pad the batch so the grid tiles it exactly (avoids tiny-divisor tiles
    # for awkward batch sizes); padded rows are sliced off afterwards.
    Bp = _round_up(B, bt)
    if Bp != B:
        feat = jnp.pad(feat, ((0, Bp - B), (0, 0), (0, 0)))
        hm = jnp.pad(hm, ((0, Bp - B), (0, 0), (0, 0)))
    grid_b = Bp // bt

    acc_bytes = bt * _padded_block_bytes((1, C, J), jnp.float32) if n_k > 1 else 0
    vmem_need = 2 * bt * per_batch_bytes + acc_bytes
    vmem_limit = int(min(max(vmem_need + (16 << 20), 32 << 20),
                         max(vmem_cap - (8 << 20), 32 << 20)))

    cost = pl.CostEstimate(
        flops=2 * B * C * J * HW,
        transcendentals=(B * J * HW if act == "sigmoid" else 0),
        bytes_accessed=B * (J * HW * hm.dtype.itemsize
                            + C * HW * feat.dtype.itemsize
                            + C * J * jnp.dtype(out_dtype).itemsize),
    )

    if n_k == 1:
        kernel = functools.partial(_pa_kernel_single, act=act)
        grid = (grid_b,)
        in_specs = [
            pl.BlockSpec((bt, J, HW), lambda i: (i, 0, 0)),
            pl.BlockSpec((bt, C, HW), lambda i: (i, 0, 0)),
        ]
        out_specs = pl.BlockSpec((bt, C, J), lambda i: (i, 0, 0))
        scratch_shapes = []
        dims = ("parallel",)
    else:
        kernel = functools.partial(_pa_kernel_ktiled, act=act)
        grid = (grid_b, n_k)  # reduction axis last, marked "arbitrary"
        in_specs = [
            pl.BlockSpec((bt, J, tk), lambda i, k: (i, 0, k)),
            pl.BlockSpec((bt, C, tk), lambda i, k: (i, 0, k)),
        ]
        out_specs = pl.BlockSpec((bt, C, J), lambda i, k: (i, 0, 0))
        scratch_shapes = [pltpu.VMEM((bt, C, J), jnp.float32)]
        dims = ("parallel", "arbitrary")

    out = pl.pallas_call(
        kernel,
        out_shape=jax.ShapeDtypeStruct((Bp, C, J), out_dtype),
        grid_spec=pltpu.PrefetchScalarGridSpec(
            num_scalar_prefetch=0,
            grid=grid,
            in_specs=in_specs,
            out_specs=out_specs,
            scratch_shapes=scratch_shapes,
        ),
        compiler_params=pltpu.CompilerParams(
            dimension_semantics=dims,
            vmem_limit_bytes=vmem_limit,
        ),
        cost_estimate=cost,
    )(hm, feat)
    return out[:B] if Bp != B else out


def _reference(features, heatmaps, act="softmax"):
    B, J, H, W = heatmaps.shape
    hm = heatmaps.reshape(B, J, H * W)
    if act == "sigmoid":
        hm = jax.nn.sigmoid(hm)
    feat = features.reshape(B, -1, H * W)
    attended = jnp.einsum("bjs,bcs->bjc", hm, feat)  # (B, J, C)
    return jnp.transpose(attended, (0, 2, 1))        # (B, C, J)


if __name__ == "__main__":
    # Small shapes consistent with the module's forward:
    #   batch=2, feature channels=32, num_joints=8, spatial 16x16
    B, C, J, H, W = 2, 32, 8, 16, 16

    key = jax.random.PRNGKey(0)
    k_feat, k_hm = jax.random.split(key)
    features = jax.random.normal(k_feat, (B, C, H, W), dtype=jnp.float32)
    heatmaps = jax.random.normal(k_hm, (B, J, H, W), dtype=jnp.float32)

    out = jax.block_until_ready(part_attention(features, heatmaps, act="softmax"))
    ref = _reference(features, heatmaps, act="softmax")
    assert out.shape == (B, C, J), out.shape
    assert jnp.allclose(out, ref, atol=1e-4, rtol=1e-4), "mismatch vs reference"

    # sigmoid activation path
    out_sig = jax.block_until_ready(part_attention(features, heatmaps, act="sigmoid"))
    ref_sig = _reference(features, heatmaps, act="sigmoid")
    assert jnp.allclose(out_sig, ref_sig, atol=1e-4, rtol=1e-4), "sigmoid mismatch"

    # Larger batch exercises the multi-batch-per-step (Bt > 1) blocking path.
    B2 = 8
    features2 = jax.random.normal(k_feat, (B2, C, H, W), dtype=jnp.float32)
    heatmaps2 = jax.random.normal(k_hm, (B2, J, H, W), dtype=jnp.float32)
    out2 = jax.block_until_ready(part_attention(features2, heatmaps2))
    ref2 = _reference(features2, heatmaps2)
    assert jnp.allclose(out2, ref2, atol=1e-4, rtol=1e-4), "batched-block mismatch"

    # Force the K-tiled accumulator path with a tiny per-step budget.
    out3 = jax.block_until_ready(
        part_attention(features2, heatmaps2, block_budget_bytes=48 * 1024))
    assert jnp.allclose(out3, ref2, atol=1e-4, rtol=1e-4), "k-tiled mismatch"

    # Awkward batch size exercises the batch-padding path.
    B3 = 7
    features3 = jax.random.normal(k_feat, (B3, C, H, W), dtype=jnp.float32)
    heatmaps3 = jax.random.normal(k_hm, (B3, J, H, W), dtype=jnp.float32)
    out4 = jax.block_until_ready(
        part_attention(features3, heatmaps3, block_budget_bytes=256 * 1024))
    ref4 = _reference(features3, heatmaps3)
    assert out4.shape == (B3, C, J), out4.shape
    assert jnp.allclose(out4, ref4, atol=1e-4, rtol=1e-4), "padded-batch mismatch"

    print("KERNEL_OK")
</pallas_src>

<mosaic_0001>
module attributes {stable_mosaic.version = 11 : i64} {
  func.func @_pa_kernel_single(%arg0: i32, %arg1: memref<2x8x256xf32, #tpu.memory_space<vmem>>, %arg2: memref<2x32x256xf32, #tpu.memory_space<vmem>>, %arg3: memref<2x32x8xf32, #tpu.memory_space<vmem>>) attributes {dimension_semantics = [#tpu.dimension_semantics<parallel>], iteration_bounds = array<i64: 1>, scalar_prefetch = 0 : i64, scratch_operands = 0 : i64, tpu.core_type = #tpu.core_type<tc>, window_params = [{transform_indices = @transform_0, window_bounds = array<i64: 2, 8, 256>}, {transform_indices = @transform_1, window_bounds = array<i64: 2, 32, 256>}, {transform_indices = @transform_2, window_bounds = array<i64: 2, 32, 8>}]} {
    %c0 = arith.constant 0 : index
    %c0_0 = arith.constant 0 : index
    %c0_1 = arith.constant 0 : index
    %0 = vector.load %arg1[%c0, %c0_0, %c0_1] : memref<2x8x256xf32, #tpu.memory_space<vmem>>, vector<2x8x256xf32>
    %c0_2 = arith.constant 0 : index
    %c0_3 = arith.constant 0 : index
    %c0_4 = arith.constant 0 : index
    %1 = vector.load %arg2[%c0_2, %c0_3, %c0_4] : memref<2x32x256xf32, #tpu.memory_space<vmem>>, vector<2x32x256xf32>
    %cst = arith.constant dense<0.000000e+00> : vector<2x32x8xf32>
    %2 = tpu.matmul %1, %0, %cst {dimension_numbers = #tpu.dot_dimension_numbers<[2], [2], [1], [1], [0, 0, 0, 1, 1, 1], [0], [0]>} : vector<2x32x256xf32>, vector<2x8x256xf32>, vector<2x32x8xf32> -> vector<2x32x8xf32>
    %c0_5 = arith.constant 0 : index
    %c0_6 = arith.constant 0 : index
    %c0_7 = arith.constant 0 : index
    %3 = vector.load %arg3[%c0_5, %c0_6, %c0_7] : memref<2x32x8xf32, #tpu.memory_space<vmem>>, vector<2x32x8xf32>
    tpu.vector_store %arg3[%c0_5, %c0_6, %c0_7], %2 {strides = array<i32>} : memref<2x32x8xf32, #tpu.memory_space<vmem>>, vector<2x32x8xf32>,
    return
  }
  func.func @transform_0(%arg0: i32) -> (i32, i32, i32) {
    %c0_i32 = arith.constant 0 : i32
    %c0_i32_0 = arith.constant 0 : i32
    %c0_i32_1 = arith.constant 0 : i32
    return %arg0, %c0_i32, %c0_i32_0 : i32, i32, i32
  }
  func.func @transform_1(%arg0: i32) -> (i32, i32, i32) {
    %c0_i32 = arith.constant 0 : i32
    %c0_i32_0 = arith.constant 0 : i32
    %c0_i32_1 = arith.constant 0 : i32
    return %arg0, %c0_i32, %c0_i32_0 : i32, i32, i32
  }
  func.func @transform_2(%arg0: i32) -> (i32, i32, i32) {
    %c0_i32 = arith.constant 0 : i32
    %c0_i32_0 = arith.constant 0 : i32
    %c0_i32_1 = arith.constant 0 : i32
    return %arg0, %c0_i32, %c0_i32_0 : i32, i32, i32
  }
}

</mosaic_0001>

<llo_original>
// kernel: tpu_custom_call.1
$region0: #{tpu_custom_call.1}
  #allocation0 [shape = 'u32[]', space=smem, size = 0x4, offset = 0x4, fixed_abs, tag = 'smem constant byte address 0x4 - core index']
  #allocation1 [shape = 'u32[144,128]{1,0:T(1,128)}', space=vmem, size = 0x12000, scoped, tag = 'internal scratch']
  %s0 = inlined_call_operand.hbm [shape: f32[2,8,256], index: 0, kind: input, shape index: {}]
  %s1 = inlined_call_operand.hbm [shape: f32[2,32,256], index: 1, kind: input, shape index: {}]
  %s2 = inlined_call_operand.vmem [shape: f32[2,32,8], index: 2, kind: output, shape index: {}]
  %s3 = sld [smem:[#allocation0]]
  $region26: #{tpu_custom_call.1} parent=0
    _
  %s5 = ssub.s32 1, %s3
  %s6 = scalar_select 0, %s5, %s3
  $region1: #{tpu_custom_call.1} parent=0
    #allocation2 [shape = 'u8[16384]{0}', space=vmem, size = 0x4000, scoped, tag = 'input window, operand 0, single buffered']
    #allocation3 [shape = 's32[1]{0}', space=sflag, size = 0x4, scoped, tag = 'scoped memory for tpu_custom_call.1']
    #allocation4 [shape = 'u8[65536]{0}', space=vmem, size = 0x10000, scoped, tag = 'input window, operand 1, single buffered']
    #allocation5 [shape = 's32[1]{0}', space=sflag, size = 0x4, scoped, tag = 'scoped memory for tpu_custom_call.1']
    %7 = vsyncpa [#allocation3], 0
    %8 = vsyncpa [#allocation5], 0
    // Predicated region
    $region2: #{tpu_custom_call.1} parent=1 // pred_check
      _
    $region3: #{tpu_custom_call.1} parent=1 // pred_check_branch
      %10 = sbr.rel (0) target = $region5
    $region4: #{tpu_custom_call.1} parent=1 // pred_region
      %s12 = ssub.s32 512, 512
      %13 = vsyncadd [#allocation3], %s12
      %s14 = sshll.u32 [#allocation2], 4
      %s15 = int_to_ptr.vmem [resolvable:$true] %s14
      %20 = dma.hbm_to_vmem [thread:$0]  %s0, 512, %s15, [#allocation3], 256, 256, 16
    $region5: #{tpu_custom_call.1} parent=1 // pred_fallthru
      _
    // Predicated region
    $region6: #{tpu_custom_call.1} parent=1 // pred_check
      _
    $region7: #{tpu_custom_call.1} parent=1 // pred_check_branch
      %22 = sbr.rel (0) target = $region9
    $region8: #{tpu_custom_call.1} parent=1 // pred_region
      %s24 = ssub.s32 2048, 2048
      %25 = vsyncadd [#allocation5], %s24
      %s26 = sshll.u32 [#allocation4], 4
      %s27 = int_to_ptr.vmem [resolvable:$true] %s26
      %32 = dma.hbm_to_vmem [thread:$0]  %s1, 2048, %s27, [#allocation5], 256, 256, 16
    $region9: #{tpu_custom_call.1} parent=1 // pred_fallthru
      _
    // Predicated region
    $region10: #{tpu_custom_call.1} parent=1 // pred_check
      _
    $region11: #{tpu_custom_call.1} parent=1 // pred_check_branch
      %34 = sbr.rel (0) target = $region13
    $region12: #{tpu_custom_call.1} parent=1 // pred_region
      %35 = dma.done [#allocation3], 512
    $region13: #{tpu_custom_call.1} parent=1 // pred_fallthru
      _
    // Predicated region
    $region14: #{tpu_custom_call.1} parent=1 // pred_check
      _
    $region15: #{tpu_custom_call.1} parent=1 // pred_check_branch
      %37 = sbr.rel (0) target = $region17
    $region16: #{tpu_custom_call.1} parent=1 // pred_region
      %38 = dma.done [#allocation5], 2048
    $region17: #{tpu_custom_call.1} parent=1 // pred_fallthru
      _
    %v39 = vld [vmem:[#allocation2] sm:$0xff]
    %v40 = vld [vmem:[#allocation2 + $0x8] sm:$0xff]
    %v41 = vld [vmem:[#allocation2 + $0x10] sm:$0xff]
    %v42 = vld [vmem:[#allocation2 + $0x18] sm:$0xff]
    %v43 = vld [vmem:[#allocation4] sm:$0xff]
    %v44 = vld [vmem:[#allocation4 + $0x8] sm:$0xff]
    %v45 = vld [vmem:[#allocation4 + $0x10] sm:$0xff]
    %v46 = vld [vmem:[#allocation4 + $0x18] sm:$0xff]
    %v47 = vld [vmem:[#allocation4 + $0x20] sm:$0xff]
    %v48 = vld [vmem:[#allocation4 + $0x28] sm:$0xff]
    %v49 = vld [vmem:[#allocation4 + $0x30] sm:$0xff]
    %v50 = vld [vmem:[#allocation4 + $0x38] sm:$0xff]
    %v51 = vld [vmem:[#allocation4 + $0x40] sm:$0xff]
    %v52 = vld [vmem:[#allocation4 + $0x48] sm:$0xff]
    %v53 = vld [vmem:[#allocation4 + $0x50] sm:$0xff]
    %v54 = vld [vmem:[#allocation4 + $0x58] sm:$0xff]
    %v55 = vld [vmem:[#allocation4 + $0x60] sm:$0xff]
    %v56 = vld [vmem:[#allocation4 + $0x68] sm:$0xff]
    %v57 = vld [vmem:[#allocation4 + $0x70] sm:$0xff]
    %v58 = vld [vmem:[#allocation4 + $0x78] sm:$0xff]
    %59 = vmatprep.subr.mxu0 %v40
    %60 = vmatpush1.xpose.msra.mxu0 %v39
    %61 = vmatprep.subr.mxu0 0.0
    %62 = vmatpush1.xpose.msra.mxu0 0.0
    %63 = vmatprep.subr.mxu0 0.0
    %64 = vmatpush1.xpose.msra.mxu0 0.0
    %65 = vmatprep.subr.mxu0 0.0
    %66 = vmatpush1.xpose.msra.mxu0 0.0
    %67 = vmatprep.subr.mxu0 0.0
    %68 = vmatpush1.xpose.msra.mxu0 0.0
    %69 = vmatprep.subr.mxu0 0.0
    %70 = vmatpush1.xpose.msra.mxu0 0.0
    %71 = vmatprep.subr.mxu0 0.0
    %72 = vmatpush1.xpose.msra.mxu0 0.0
    %73 = vmatprep.subr.mxu0 0.0
    %74 = vmatpush1.xpose.msra.mxu0 0.0
    %75 = vmatprep.subr.mxu0 0.0
    %76 = vmatpush1.xpose.msra.mxu0 0.0
    %77 = vmatprep.subr.mxu0 0.0
    %78 = vmatpush1.xpose.msra.mxu0 0.0
    %79 = vmatprep.subr.mxu0 0.0
    %80 = vmatpush1.xpose.msra.mxu0 0.0
    %81 = vmatprep.subr.mxu0 0.0
    %82 = vmatpush1.xpose.msra.mxu0 0.0
    %83 = vmatprep.subr.mxu0 0.0
    %84 = vmatpush1.xpose.msra.mxu0 0.0
    %85 = vmatprep.subr.mxu0 0.0
    %86 = vmatpush1.xpose.msra.mxu0 0.0
    %87 = vmatprep.subr.mxu0 0.0
    %88 = vmatpush1.xpose.msra.mxu0 0.0
    %89 = vmatprep.subr.mxu0 0.0
    %90 = vmatpush1.xpose.msra.mxu0 0.0
    %91 = vmatprep.subr.mxu0 0.0
    %92 = vmatpush1.xpose.msra.mxu0 0.0
    %93 = vmatprep.subr.mxu0 0.0
    %94 = vmatpush1.xpose.msra.mxu0 0.0
    %95 = vmatprep.subr.mxu0 0.0
    %96 = vmatpush1.xpose.msra.mxu0 0.0
    %97 = vmatprep.subr.mxu0 0.0
    %98 = vmatpush1.xpose.msra.mxu0 0.0
    %99 = vmatprep.subr.mxu0 0.0
    %100 = vmatpush1.xpose.msra.mxu0 0.0
    %101 = vmatprep.subr.mxu0 0.0
    %102 = vmatpush1.xpose.msra.mxu0 0.0
    %103 = vmatprep.subr.mxu0 0.0
    %104 = vmatpush1.xpose.msra.mxu0 0.0
    %105 = vmatprep.subr.mxu0 0.0
    %106 = vmatpush1.xpose.msra.mxu0 0.0
    %107 = vmatprep.subr.mxu0 0.0
    %108 = vmatpush1.xpose.msra.mxu0 0.0
    %109 = vmatprep.subr.mxu0 0.0
    %110 = vmatpush1.xpose.msra.mxu0 0.0
    %111 = vmatprep.subr.mxu0 0.0
    %112 = vmatpush1.xpose.msra.mxu0 0.0
    %113 = vmatprep.subr.mxu0 0.0
    %114 = vmatpush1.xpose.msra.mxu0 0.0
    %115 = vmatprep.subr.mxu0 0.0
    %116 = vmatpush1.xpose.msra.mxu0 0.0
    %117 = vmatprep.subr.mxu0 0.0
    %118 = vmatpush1.xpose.msra.mxu0 0.0
    %119 = vmatprep.subr.mxu0 0.0
    %120 = vmatpush1.xpose.msra.mxu0 0.0
    %121 = vmatprep.subr.mxu0 0.0
    %122 = vmatpush1.xpose.msra.mxu0 0.0
    %123 = vmatprep.mubr.f32.mxu0 %v44
    %124 = vmatmul.mubr.f32.gmra.mrb[0].mxu0 %v43
    %v125 = vpop.f32.mrb[0].mxu0
    %v126 = vadd.f32 0.0, %v125
    %v127 = vpop.f32.mrb[0].mxu0
    %128 = vmatprep.mubr.f32.mxu0 %v46
    %129 = vmatmul.mubr.f32.gmra.mrb[0].mxu0 %v45
    %v130 = vpop.f32.mrb[0].mxu0
    %v131 = vadd.f32 0.0, %v130
    %v132 = vpop.f32.mrb[0].mxu0
    %133 = vmatprep.mubr.f32.mxu0 %v48
    %134 = vmatmul.mubr.f32.gmra.mrb[0].mxu0 %v47
    %v135 = vpop.f32.mrb[0].mxu0
    %v136 = vadd.f32 0.0, %v135
    %v137 = vpop.f32.mrb[0].mxu0
    %138 = vmatprep.mubr.f32.mxu0 %v50
    %139 = vmatmul.mubr.f32.gmra.mrb[0].mxu0 %v49
    %v140 = vpop.f32.mrb[0].mxu0
    %v141 = vadd.f32 0.0, %v140
    %v142 = vpop.f32.mrb[0].mxu0
    %143 = vdwg.mxu0
    %144 = vmatprep.subr.mxu0 %v42
    %145 = vmatpush1.xpose.msra.mxu0 %v41
    %146 = vmatprep.subr.mxu0 0.0
    %147 = vmatpush1.xpose.msra.mxu0 0.0
    %148 = vmatprep.subr.mxu0 0.0
    %149 = vmatpush1.xpose.msra.mxu0 0.0
    %150 = vmatprep.subr.mxu0 0.0
    %151 = vmatpush1.xpose.msra.mxu0 0.0
    %152 = vmatprep.subr.mxu0 0.0
    %153 = vmatpush1.xpose.msra.mxu0 0.0
    %154 = vmatprep.subr.mxu0 0.0
    %155 = vmatpush1.xpose.msra.mxu0 0.0
    %156 = vmatprep.subr.mxu0 0.0
    %157 = vmatpush1.xpose.msra.mxu0 0.0
    %158 = vmatprep.subr.mxu0 0.0
    %159 = vmatpush1.xpose.msra.mxu0 0.0
    %160 = vmatprep.subr.mxu0 0.0
    %161 = vmatpush1.xpose.msra.mxu0 0.0
    %162 = vmatprep.subr.mxu0 0.0
    %163 = vmatpush1.xpose.msra.mxu0 0.0
    %164 = vmatprep.subr.mxu0 0.0
    %165 = vmatpush1.xpose.msra.mxu0 0.0
    %166 = vmatprep.subr.mxu0 0.0
    %167 = vmatpush1.xpose.msra.mxu0 0.0
    %168 = vmatprep.subr.mxu0 0.0
    %169 = vmatpush1.xpose.msra.mxu0 0.0
    %170 = vmatprep.subr.mxu0 0.0
    %171 = vmatpush1.xpose.msra.mxu0 0.0
    %172 = vmatprep.subr.mxu0 0.0
    %173 = vmatpush1.xpose.msra.mxu0 0.0
    %174 = vmatprep.subr.mxu0 0.0
    %175 = vmatpush1.xpose.msra.mxu0 0.0
    %176 = vmatprep.subr.mxu0 0.0
    %177 = vmatpush1.xpose.msra.mxu0 0.0
    %178 = vmatprep.subr.mxu0 0.0
    %179 = vmatpush1.xpose.msra.mxu0 0.0
    %180 = vmatprep.subr.mxu0 0.0
    %181 = vmatpush1.xpose.msra.mxu0 0.0
    %182 = vmatprep.subr.mxu0 0.0
    %183 = vmatpush1.xpose.msra.mxu0 0.0
    %184 = vmatprep.subr.mxu0 0.0
    %185 = vmatpush1.xpose.msra.mxu0 0.0
    %186 = vmatprep.subr.mxu0 0.0
    %187 = vmatpush1.xpose.msra.mxu0 0.0
    %188 = vmatprep.subr.mxu0 0.0
    %189 = vmatpush1.xpose.msra.mxu0 0.0
    %190 = vmatprep.subr.mxu0 0.0
    %191 = vmatpush1.xpose.msra.mxu0 0.0
    %192 = vmatprep.subr.mxu0 0.0
    %193 = vmatpush1.xpose.msra.mxu0 0.0
    %194 = vmatprep.subr.mxu0 0.0
    %195 = vmatpush1.xpose.msra.mxu0 0.0
    %196 = vmatprep.subr.mxu0 0.0
    %197 = vmatpush1.xpose.msra.mxu0 0.0
    %198 = vmatprep.subr.mxu0 0.0
    %199 = vmatpush1.xpose.msra.mxu0 0.0
    %200 = vmatprep.subr.mxu0 0.0
    %201 = vmatpush1.xpose.msra.mxu0 0.0
    %202 = vmatprep.subr.mxu0 0.0
    %203 = vmatpush1.xpose.msra.mxu0 0.0
    %204 = vmatprep.subr.mxu0 0.0
    %205 = vmatpush1.xpose.msra.mxu0 0.0
    %206 = vmatprep.subr.mxu0 0.0
    %207 = vmatpush1.xpose.msra.mxu0 0.0
    %208 = vmatprep.mubr.f32.mxu0 %v52
    %209 = vmatmul.mubr.f32.gmra.mrb[0].mxu0 %v51
    %v210 = vpop.f32.mrb[0].mxu0
    %v211 = vadd.f32 0.0, %v210
    %v212 = vpop.f32.mrb[0].mxu0
    %213 = vmatprep.mubr.f32.mxu0 %v54
    %214 = vmatmul.mubr.f32.gmra.mrb[0].mxu0 %v53
    %v215 = vpop.f32.mrb[0].mxu0
    %v216 = vadd.f32 0.0, %v215
    %v217 = vpop.f32.mrb[0].mxu0
    %218 = vmatprep.mubr.f32.mxu0 %v56
    %219 = vmatmul.mubr.f32.gmra.mrb[0].mxu0 %v55
    %v220 = vpop.f32.mrb[0].mxu0
    %v221 = vadd.f32 0.0, %v220
    %v222 = vpop.f32.mrb[0].mxu0
    %223 = vmatprep.mubr.f32.mxu0 %v58
    %224 = vmatmul.mubr.f32.gmra.mrb[0].mxu0 %v57
    %v225 = vpop.f32.mrb[0].mxu0
    %v226 = vadd.f32 0.0, %v225
    %v227 = vpop.f32.mrb[0].mxu0
    %228 = vdwg.mxu0
    %vm229 = vcmask 64512
    %230 = vst.msk [vmem:[%s2] sm:$0xff] %vm229, %v126
    %231 = vst.msk [vmem:[%s2 + $0x8] sm:$0xff] %vm229, %v131
    %232 = vst.msk [vmem:[%s2 + $0x10] sm:$0xff] %vm229, %v136
    %233 = vst.msk [vmem:[%s2 + $0x18] sm:$0xff] %vm229, %v141
    %234 = vst.msk [vmem:[%s2 + $0x20] sm:$0xff] %vm229, %v211
    %235 = vst.msk [vmem:[%s2 + $0x28] sm:$0xff] %vm229, %v216
    %236 = vst.msk [vmem:[%s2 + $0x30] sm:$0xff] %vm229, %v221
    %237 = vst.msk [vmem:[%s2 + $0x38] sm:$0xff] %vm229, %v226
    // Predicated region
    $region18: #{tpu_custom_call.1} parent=1 // pred_check
      _
    $region19: #{tpu_custom_call.1} parent=1 // pred_check_branch
      %239 = sbr.rel (0) target = $region21
    $region20: #{tpu_custom_call.1} parent=1 // pred_region
      _
    $region21: #{tpu_custom_call.1} parent=1 // pred_fallthru
      _
    // Predicated region
    $region22: #{tpu_custom_call.1} parent=1 // pred_check
      _
    $region23: #{tpu_custom_call.1} parent=1 // pred_check_branch
      %241 = sbr.rel (0) target = $region25
    $region24: #{tpu_custom_call.1} parent=1 // pred_region
      _
    $region25: #{tpu_custom_call.1} parent=1 // pred_fallthru
      _
    %242 = vsyncpa [#allocation3], 1
    %243 = vsyncpa [#allocation5], 1

</llo_original>
